<compile_context>
chip_gen: v5e
topology: v5e:2x2
jax: 0.10.0
libtpu: 0.0.40
codegen_flags: <defaults>
</compile_context>

<pallas_src>
import functools

import numpy as np
import jax
import jax.numpy as jnp
from jax.experimental import pallas as pl
from jax.experimental.pallas import tpu as pltpu


def _round_up(x, m):
    return ((x + m - 1) // m) * m


def _choose_packing(D, lane_cap=1024):
    """Pick G timestamps per output row (W = G*D lanes) for lane-dense stores."""
    if D <= 0:
        return 1, 1
    if D >= lane_cap:
        return 1, D
    best_g, best_density = 1, 0.0
    for g in range(1, lane_cap // D + 1):
        w = g * D
        density = w / _round_up(w, 128)
        if density > best_density + 1e-9:
            best_g, best_density = g, density
            if density >= 1.0 - 1e-9:      # smallest G with fully dense stores
                break
    return best_g, best_g * D


def _time_encode_kernel(ts_ref, fb_ref, ph_ref, out_ref, *, use_dot):
    # ts_ref : (TR, G) f32 — G packed timestamps per output row (lane-dense)
    # fb_ref : (G, W)  f32 — block-diagonal freqs: fb[g, g*D + d] = basis_freq[d]
    # ph_ref : (1, W)  f32 — phase tiled across the G lane groups
    # out_ref: (TR, W) out_dtype — bytes identical to row-major (TR*G, D)
    if use_dot:
        # Small D / large G: one MXU matmul (MXU idle otherwise) instead of a
        # G-term VALU multiply-add chain that would bind the 4-wide VALU slot.
        acc = jnp.dot(ts_ref[...], fb_ref[...],
                      preferred_element_type=jnp.float32) + ph_ref[...]
    else:
        # Small G: the zero-masked multiply-add chain is filler under the
        # single-slot EUP cos and the store/HBM-writeback path.
        G = fb_ref.shape[0]
        acc = ph_ref[...] + ts_ref[:, 0:1] * fb_ref[0:1, :]
        for g in range(1, G):
            acc = acc + ts_ref[:, g:g + 1] * fb_ref[g:g + 1, :]
    out_ref[...] = jnp.cos(acc).astype(out_ref.dtype)


def make_time_encode(basis_freq, phase, *, out_dtype=jnp.float32,
                     block_rows=2048, lane_cap=1024,
                     target_block_bytes=2 * 1024 * 1024):
    """Build an encode(ts: (B, L)) -> (B, L, D) fn with params packed once."""
    basis_freq = jnp.asarray(basis_freq, jnp.float32)
    phase = jnp.asarray(phase, jnp.float32)
    D = int(basis_freq.shape[0])
    G, W = _choose_packing(D, lane_cap)

    # Hoisted per-parameter-set preprocessing (review: don't rebuild per call).
    lane_group = (jnp.arange(W, dtype=jnp.int32) // D)[None, :]           # (1, W)
    freq_tiled = jnp.tile(basis_freq, (G,))[None, :]                      # (1, W)
    fb = jnp.where(lane_group == jnp.arange(G, dtype=jnp.int32)[:, None],
                   freq_tiled, jnp.float32(0.0))                          # (G, W)
    ph = jnp.tile(phase, (G,))[None, :]                                   # (1, W)

    use_dot = G >= 16
    kernel = functools.partial(_time_encode_kernel, use_dot=use_dot)
    itemsize = jnp.dtype(out_dtype).itemsize

    def encode(ts):
        ts = jnp.asarray(ts, jnp.float32)
        B, L = ts.shape
        N = B * L
        if N == 0:                                    # zero-size edge case
            return jnp.zeros((B, L, D), out_dtype)
        R = -(-N // G)                                # output rows, G ts each

        # Row tile: ~target_block_bytes output block, sublane-aligned, and at
        # least 2 grid steps when possible so the "parallel" axis can shard
        # across both v7x TensorCores.
        tr_cap = max(8, (target_block_bytes // (W * itemsize)) // 8 * 8)
        TR = min(int(block_rows), tr_cap, _round_up(R, 8))
        TR = max(8, _round_up(TR, 8))
        if -(-R // TR) < 2 and R > 8:
            TR = _round_up(-(-R // 2), 8)
        R_pad = _round_up(R, TR)
        grid = (R_pad // TR,)

        # ts laid out lane-dense as (R_pad, G): row r holds ts[r*G : (r+1)*G].
        ts_flat = ts.reshape(-1)
        pad = R_pad * G - N
        if pad:
            ts_flat = jnp.pad(ts_flat, (0, pad))
        ts_rows = ts_flat.reshape(R_pad, G)

        out = pl.pallas_call(
            kernel,
            out_shape=jax.ShapeDtypeStruct((R_pad, W), out_dtype),
            grid=grid,
            in_specs=[
                pl.BlockSpec((TR, G), lambda i: (i, 0)),   # ts row tile
                pl.BlockSpec((G, W), lambda i: (0, 0)),    # freqs (tiny, resident)
                pl.BlockSpec((1, W), lambda i: (0, 0)),    # phase (resident)
            ],
            out_specs=pl.BlockSpec((TR, W), lambda i: (i, 0)),
            compiler_params=pltpu.CompilerParams(
                dimension_semantics=("parallel",)),
            cost_estimate=pl.CostEstimate(
                flops=int(2 * R_pad * G * W),
                transcendentals=int(R_pad * W),
                bytes_accessed=int(4 * (R_pad * G + (G + 1) * W)
                                   + R_pad * W * itemsize)),
        )(ts_rows, fb, ph)

        # (R_pad, W) row-major bytes == (R_pad*G, D) row-major: trim + reshape
        # back to (B, L, D) is free (same contiguous bytes).
        return out.reshape(-1)[: N * D].reshape(B, L, D)

    return jax.jit(encode)


def time_encode(ts, basis_freq, phase, *, out_dtype=jnp.float32, block_rows=2048):
    """Convenience one-shot wrapper (prefer make_time_encode for repeated calls)."""
    return make_time_encode(basis_freq, phase, out_dtype=out_dtype,
                            block_rows=block_rows)(ts)


def make_time_encode_params(expand_dim):
    """Deterministic parameter init matching TimeEncode.__init__."""
    basis_freq = (1.0 / 10.0 ** np.linspace(0, 9, expand_dim)).astype(np.float32)
    phase = np.zeros((expand_dim,), dtype=np.float32)
    return jnp.asarray(basis_freq), jnp.asarray(phase)


def time_encode_ref(ts, basis_freq, phase):
    return jnp.cos(ts[:, :, None] * basis_freq[None, None, :]
                   + phase[None, None, :])


if __name__ == "__main__":
    # Primary small test matching typical module usage (batch=2, seq=8, dim=32).
    B, L, D = 2, 8, 32
    bf, phs = make_time_encode_params(D)
    ts = jax.random.uniform(jax.random.PRNGKey(0), (B, L), dtype=jnp.float32) * 100.0
    enc = make_time_encode(bf, phs)
    out = jax.block_until_ready(enc(ts))
    assert out.shape == (B, L, D)
    np.testing.assert_allclose(np.asarray(out),
                               np.asarray(time_encode_ref(ts, bf, phs)),
                               rtol=1e-5, atol=1e-5)

    # Multi-tile grid (>= 2 steps) + row padding; MAC path (G = 4, W = 128).
    B2, L2, D2 = 8, 520, 32
    bf2, ph2 = make_time_encode_params(D2)
    ts2 = jax.random.uniform(jax.random.PRNGKey(1), (B2, L2), dtype=jnp.float32) * 100.0
    out2 = jax.block_until_ready(make_time_encode(bf2, ph2)(ts2))
    np.testing.assert_allclose(np.asarray(out2),
                               np.asarray(time_encode_ref(ts2, bf2, ph2)),
                               rtol=1e-5, atol=1e-5)

    # D = 100 (common TGAT dim, does not divide 128): packing picks G=5, W=500
    # (97.7% lane density); MAC path with a non-128-multiple output width.
    B3, L3, D3 = 3, 70, 100
    bf3, ph3 = make_time_encode_params(D3)
    ts3 = jax.random.uniform(jax.random.PRNGKey(2), (B3, L3), dtype=jnp.float32) * 100.0
    out3 = jax.block_until_ready(make_time_encode(bf3, ph3)(ts3))
    np.testing.assert_allclose(np.asarray(out3),
                               np.asarray(time_encode_ref(ts3, bf3, ph3)),
                               rtol=1e-5, atol=1e-5)

    # Small D -> large G (G = 32 >= 16): MXU dot path; slightly looser tolerance
    # since the f32 matmul may round differently from an elementwise multiply.
    B4, L4, D4 = 4, 33, 4
    bf4, ph4 = make_time_encode_params(D4)
    ts4 = jax.random.uniform(jax.random.PRNGKey(3), (B4, L4), dtype=jnp.float32) * 100.0
    out4 = jax.block_until_ready(make_time_encode(bf4, ph4)(ts4))
    np.testing.assert_allclose(np.asarray(out4),
                               np.asarray(time_encode_ref(ts4, bf4, ph4)),
                               rtol=1e-3, atol=5e-4)

    # Optional bf16 writeback (halves HBM writeback bytes; big win on v5e/v6e).
    out_bf16 = jax.block_until_ready(
        make_time_encode(bf, phs, out_dtype=jnp.bfloat16)(ts))
    np.testing.assert_allclose(np.asarray(out_bf16, dtype=np.float32),
                               np.asarray(time_encode_ref(ts, bf, phs)),
                               rtol=2e-2, atol=8e-3)

    print("KERNEL_OK")
</pallas_src>

<mosaic_0001>
module attributes {stable_mosaic.version = 11 : i64} {
  func.func @_time_encode_kernel(%arg0: i32, %arg1: memref<8x4xf32, #tpu.memory_space<vmem>>, %arg2: memref<4x128xf32, #tpu.memory_space<vmem>>, %arg3: memref<1x128xf32, #tpu.memory_space<vmem>>, %arg4: memref<8x128xf32, #tpu.memory_space<vmem>>) attributes {dimension_semantics = [#tpu.dimension_semantics<parallel>], iteration_bounds = array<i64: 1>, scalar_prefetch = 0 : i64, scratch_operands = 0 : i64, tpu.core_type = #tpu.core_type<tc>, window_params = [{transform_indices = @transform_0, window_bounds = array<i64: 8, 4>}, {pipeline_mode = #tpu.pipeline_mode<synchronous>, transform_indices = @transform_1, window_bounds = array<i64: 4, 128>}, {pipeline_mode = #tpu.pipeline_mode<synchronous>, transform_indices = @transform_2, window_bounds = array<i64: 1, 128>}, {transform_indices = @transform_3, window_bounds = array<i64: 8, 128>}]} {
    %c0 = arith.constant 0 : index
    %c0_0 = arith.constant 0 : index
    %0 = vector.load %arg3[%c0, %c0_0] : memref<1x128xf32, #tpu.memory_space<vmem>>, vector<1x128xf32>
    %c0_1 = arith.constant 0 : index
    %c0_2 = arith.constant 0 : index
    %1 = vector.load %arg1[%c0_1, %c0_2] : memref<8x4xf32, #tpu.memory_space<vmem>>, vector<8x1xf32>
    %c0_3 = arith.constant 0 : index
    %c0_4 = arith.constant 0 : index
    %2 = vector.load %arg2[%c0_3, %c0_4] : memref<4x128xf32, #tpu.memory_space<vmem>>, vector<1x128xf32>
    %3 = vector.broadcast %1 : vector<8x1xf32> to vector<8x128xf32>
    %4 = vector.broadcast %2 : vector<1x128xf32> to vector<8x128xf32>
    %5 = arith.mulf %3, %4 : vector<8x128xf32>
    %6 = vector.broadcast %0 : vector<1x128xf32> to vector<8x128xf32>
    %7 = arith.addf %6, %5 : vector<8x128xf32>
    %c0_5 = arith.constant 0 : index
    %c1 = arith.constant 1 : index
    %8 = vector.load %arg1[%c0_5, %c1] : memref<8x4xf32, #tpu.memory_space<vmem>>, vector<8x1xf32>
    %c1_6 = arith.constant 1 : index
    %c0_7 = arith.constant 0 : index
    %9 = vector.load %arg2[%c1_6, %c0_7] : memref<4x128xf32, #tpu.memory_space<vmem>>, vector<1x128xf32>
    %10 = vector.broadcast %8 : vector<8x1xf32> to vector<8x128xf32>
    %11 = vector.broadcast %9 : vector<1x128xf32> to vector<8x128xf32>
    %12 = arith.mulf %10, %11 : vector<8x128xf32>
    %13 = arith.addf %7, %12 : vector<8x128xf32>
    %c0_8 = arith.constant 0 : index
    %c2 = arith.constant 2 : index
    %14 = vector.load %arg1[%c0_8, %c2] : memref<8x4xf32, #tpu.memory_space<vmem>>, vector<8x1xf32>
    %c2_9 = arith.constant 2 : index
    %c0_10 = arith.constant 0 : index
    %15 = vector.load %arg2[%c2_9, %c0_10] : memref<4x128xf32, #tpu.memory_space<vmem>>, vector<1x128xf32>
    %16 = vector.broadcast %14 : vector<8x1xf32> to vector<8x128xf32>
    %17 = vector.broadcast %15 : vector<1x128xf32> to vector<8x128xf32>
    %18 = arith.mulf %16, %17 : vector<8x128xf32>
    %19 = arith.addf %13, %18 : vector<8x128xf32>
    %c0_11 = arith.constant 0 : index
    %c3 = arith.constant 3 : index
    %20 = vector.load %arg1[%c0_11, %c3] : memref<8x4xf32, #tpu.memory_space<vmem>>, vector<8x1xf32>
    %c3_12 = arith.constant 3 : index
    %c0_13 = arith.constant 0 : index
    %21 = vector.load %arg2[%c3_12, %c0_13] : memref<4x128xf32, #tpu.memory_space<vmem>>, vector<1x128xf32>
    %22 = vector.broadcast %20 : vector<8x1xf32> to vector<8x128xf32>
    %23 = vector.broadcast %21 : vector<1x128xf32> to vector<8x128xf32>
    %24 = arith.mulf %22, %23 : vector<8x128xf32>
    %25 = arith.addf %19, %24 : vector<8x128xf32>
    %26 = math.cos %25 : vector<8x128xf32>
    %c0_14 = arith.constant 0 : index
    %c0_15 = arith.constant 0 : index
    %27 = vector.load %arg4[%c0_14, %c0_15] : memref<8x128xf32, #tpu.memory_space<vmem>>, vector<8x128xf32>
    tpu.vector_store %arg4[%c0_14, %c0_15], %26 {strides = array<i32>} : memref<8x128xf32, #tpu.memory_space<vmem>>, vector<8x128xf32>,
    return
  }
  func.func @transform_0(%arg0: i32) -> (i32, i32) {
    %c0_i32 = arith.constant 0 : i32
    %c0_i32_0 = arith.constant 0 : i32
    return %arg0, %c0_i32 : i32, i32
  }
  func.func @transform_1(%arg0: i32) -> (i32, i32) {
    %c0_i32 = arith.constant 0 : i32
    %c0_i32_0 = arith.constant 0 : i32
    %c0_i32_1 = arith.constant 0 : i32
    return %c0_i32, %c0_i32_0 : i32, i32
  }
  func.func @transform_2(%arg0: i32) -> (i32, i32) {
    %c0_i32 = arith.constant 0 : i32
    %c0_i32_0 = arith.constant 0 : i32
    %c0_i32_1 = arith.constant 0 : i32
    return %c0_i32, %c0_i32_0 : i32, i32
  }
  func.func @transform_3(%arg0: i32) -> (i32, i32) {
    %c0_i32 = arith.constant 0 : i32
    %c0_i32_0 = arith.constant 0 : i32
    return %arg0, %c0_i32 : i32, i32
  }
}

</mosaic_0001>

<llo_original>
// kernel: encode.1
$region0: #{encode.1}
  #allocation0 [shape = 'u32[]', space=smem, size = 0x4, offset = 0x4, fixed_abs, tag = 'smem constant byte address 0x4 - core index']
  #allocation1 [shape = 'u32[72,128]{1,0:T(1,128)}', space=vmem, size = 0x9000, scoped, tag = 'internal scratch']
  %s0 = inlined_call_operand.vmem [shape: f32[8,4], index: 0, kind: input, shape index: {}]
  %s1 = inlined_call_operand.vmem [shape: f32[4,128], index: 1, kind: input, shape index: {}]
  %s2 = inlined_call_operand.vmem [shape: f32[1,128], index: 2, kind: input, shape index: {}]
  %s3 = inlined_call_operand.vmem [shape: f32[8,128], index: 3, kind: output, shape index: {}]
  %s4 = sld [smem:[#allocation0]]
  $region22: #{encode.1} parent=0
    _
  %s6 = ssub.s32 1, %s4
  %s7 = scalar_select 0, %s6, %s4
  // Predicated region
  $region2: #{encode.1} parent=0 // pred_check
    _
  $region3: #{encode.1} parent=0 // pred_check_branch
    %9 = sbr.rel (0) target = $region5
  $region4: #{encode.1} parent=0 // pred_region
    _
  $region5: #{encode.1} parent=0 // pred_fallthru
    _
  // Predicated region
  $region6: #{encode.1} parent=0 // pred_check
    _
  $region7: #{encode.1} parent=0 // pred_check_branch
    %11 = sbr.rel (0) target = $region9
  $region8: #{encode.1} parent=0 // pred_region
    _
  $region9: #{encode.1} parent=0 // pred_fallthru
    _
  // Predicated region
  $region10: #{encode.1} parent=0 // pred_check
    _
  $region11: #{encode.1} parent=0 // pred_check_branch
    %13 = sbr.rel (0) target = $region13
  $region12: #{encode.1} parent=0 // pred_region
    _
  $region13: #{encode.1} parent=0 // pred_fallthru
    _
  %v14 = vld [vmem:[%s2] sm:$0x1]
  %v15 = vld [vmem:[%s0] sm:$0xff]
  %v16 = vld [vmem:[%s1] sm:$0x1]
  %18 = vset.pattern.permute.xlu0 0
  %19 = vperm.xlu0 %18, %v15
  %v20 = vpop.permute.xlu0 %19
  %v22 = vperm.slane %v16, 0
  %v23 = vmul.f32 %v20, %v22
  %v25 = vperm.slane %v14, 0
  %v27 = vadd.f32 %v25, %v23
  %v28 = vld [vmem:[%s1 + $0x1] sm:$0x1]
  %29 = vset.pattern.permute.xlu0 1
  %30 = vperm.xlu0 %29, %v15
  %v31 = vpop.permute.xlu0 %30
  %v33 = vperm.slane %v28, 0
  %v34 = vmul.f32 %v31, %v33
  %v35 = vadd.f32 %v27, %v34
  %v36 = vld [vmem:[%s1 + $0x2] sm:$0x1]
  %37 = vset.pattern.permute.xlu0 2
  %38 = vperm.xlu0 %37, %v15
  %v39 = vpop.permute.xlu0 %38
  %v41 = vperm.slane %v36, 0
  %v42 = vmul.f32 %v39, %v41
  %v43 = vadd.f32 %v35, %v42
  %v44 = vld [vmem:[%s1 + $0x3] sm:$0x1]
  %45 = vset.pattern.permute.xlu0 3
  %46 = vperm.xlu0 %45, %v15
  %v47 = vpop.permute.xlu0 %46
  %v49 = vperm.slane %v44, 0
  %v50 = vmul.f32 %v47, %v49
  %v51 = vadd.f32 %v43, %v50
  %v52 = vand.u32 2147483647, %v51
  %vm53 = vcmp.le.f32.partialorder %v52, 0.7853982
  %vm54 = vcmp.lt.s32.totalorder %v51, 0
  %v55 = vand.u32 %v51, 2139095040
  %v56 = vshrl.u32 %v55, 23
  %v57 = vsub.s32 %v56, 127
  %v58 = vand.u32 2147483647, %v51
  %v59 = vand.u32 %v58, 8388607
  %v60 = vor.u32 %v59, 8388608
  %v61 = vsub.s32 0, %v60
  %v62 = vadd.s32 %v57, 1
  %vm63 = vcmp.gt.s32.totalorder %v62, 0
  %v64 = vsel %vm63, %v62, 0
  %v65 = vshrl.u32 %v64, 5
  %v66 = vand.u32 %v64, 31
  %v67 = vsub.s32 32, %v66
  %v68 = vshrl.u32 683565275, %v67
  %v69 = vshll.u32 683565275, %v66
  %v70 = vshrl.u32 2475754826, %v67
  %v71 = vor.u32 %v69, %v70
  %v72 = vshll.u32 2475754826, %v66
  %v73 = vshrl.u32 2131351028, %v67
  %v74 = vor.u32 %v72, %v73
  %v75 = vshll.u32 2131351028, %v66
  %v76 = vshrl.u32 2102212464, %v67
  %v77 = vor.u32 %v75, %v76
  %v78 = vshll.u32 2102212464, %v66
  %v79 = vshrl.u32 920167782, %v67
  %v80 = vor.u32 %v78, %v79
  %v81 = vshll.u32 920167782, %v66
  %v82 = vshrl.u32 1326507024, %v67
  %v83 = vor.u32 %v81, %v82
  %vm84 = vcmp.lt.s32.totalorder %v65, 1
  %vm85 = vcmp.lt.s32.totalorder %v65, 2
  %vm86 = vcmp.lt.s32.totalorder %v65, 3
  %vm87 = vcmp.lt.s32.totalorder %v65, 4
  %v88 = vsel %vm84, %v68, %v71
  %v89 = vsel %vm87, %v77, 2102212464
  %v90 = vsel %vm86, %v74, %v89
  %v91 = vsel %vm85, %v88, %v90
  %v92 = vsel %vm84, %v71, %v74
  %v93 = vsel %vm87, %v80, 920167782
  %v94 = vsel %vm86, %v77, %v93
  %v95 = vsel %vm85, %v92, %v94
  %v96 = vsel %vm84, %v74, %v77
  %v97 = vsel %vm87, %v83, 1326507024
  %v98 = vsel %vm86, %v80, %v97
  %v99 = vsel %vm85, %v96, %v98
  %v100 = vshll.u32 %v60, 8
  %v101 = vand.u32 %v100, 65535
  %v102 = vshrl.u32 %v100, 16
  %v103 = vand.u32 %v99, 65535
  %v104 = vshrl.u32 %v99, 16
  %v105 = vmul.u32 %v101, %v103
  %v106 = vmul.u32 %v101, %v104
  %v107 = vmul.u32 %v102, %v103
  %v108 = vmul.u32 %v102, %v104
  %v109 = vshll.u32 %v106, 16
  %v110 = vshrl.u32 %v106, 16
  %v111 = vshll.u32 %v107, 16
  %v112 = vshrl.u32 %v107, 16
  %vm113 = vc.u32 %v105, %v109
  %v114 = vsel %vm113, 1, 0
  %v115 = vadd.s32 %v105, %v109
  %v116 = vadd.s32 %v108, %v114
  %vm117 = vc.u32 %v115, %v111
  %v118 = vsel %vm117, 1, 0
  %v119 = vadd.s32 %v115, %v111
  %v120 = vadd.s32 %v116, %v118
  %v121 = vadd.s32 %v120, %v110
  %v122 = vadd.s32 %v121, %v112
  %v123 = vand.u32 %v100, 65535
  %v124 = vshrl.u32 %v100, 16
  %v125 = vand.u32 %v95, 65535
  %v126 = vshrl.u32 %v95, 16
  %v127 = vmul.u32 %v123, %v125
  %v128 = vmul.u32 %v123, %v126
  %v129 = vmul.u32 %v124, %v125
  %v130 = vmul.u32 %v124, %v126
  %v131 = vshll.u32 %v128, 16
  %v132 = vshrl.u32 %v128, 16
  %v133 = vshll.u32 %v129, 16
  %v134 = vshrl.u32 %v129, 16
  %vm135 = vc.u32 %v127, %v131
  %v136 = vsel %vm135, 1, 0
  %v137 = vadd.s32 %v127, %v131
  %v138 = vadd.s32 %v130, %v136
  %vm139 = vc.u32 %v137, %v133
  %v140 = vsel %vm139, 1, 0
  %v141 = vadd.s32 %v137, %v133
  %v142 = vadd.s32 %v138, %v140
  %v143 = vadd.s32 %v142, %v132
  %v144 = vadd.s32 %v143, %v134
  %v145 = vmul.u32 %v100, %v91
  %v146 = vadd.s32 %v122, %v141
  %vm147 = vc.u32 %v122, %v141
  %v148 = vadd.s32 %v144, 1
  %v149 = vsel %vm147, %v148, %v144
  %v150 = vadd.s32 %v145, %v149
  %v151 = vadd.s32 %v150, 536870912
  %v152 = vshrl.u32 %v151, 30
  %v153 = vshll.u32 %v152, 30
  %v154 = vsub.s32 %v150, %v153
  %vm155 = vcmp.lt.s32.totalorder %v154, 0
  %v156 = vsub.s32 0, %v154
  %v157 = vsel %vm155, %v156, %v154
  %v158 = vclz %v157
  %v159 = vsub.s32 %v158, 2
  %vm160 = vcmp.gt.s32.totalorder 0, %v159
  %v161 = vsel %vm160, 0, %v159
  %v162 = vsub.s32 32, %v161
  %v163 = vshll.u32 %v154, %v161
  %v164 = vshrl.u32 %v146, %v162
  %v165 = vor.u32 %v163, %v164
  %v166 = vsub.s32 4294967266, %v161
  %v167 = vadd.s32 %v166, 127
  %v168 = vshll.u32 %v167, 23
  %v169 = vor.u32 4788187, %v168
  %v170 = vand.u32 2147483647, %v169
  %v172 = vcvt.s32.f32 %v165
  %v173 = vmul.f32 %v172, %v170
  %v174 = vxor.u32 %v173, 2147483648
  %v175 = vsel %vm54, %v174, %v173
  %v176 = vsub.s32 4, %v152
  %v177 = vsel %vm54, %v176, %v152
  %v178 = vsel %vm53, %v51, %v175
  %v179 = vsel %vm53, 0, %v177
  %v180 = vmul.f32 %v178, %v178
  %v181 = vmul.f32 %v180, -0.001358992
  %v182 = vadd.f32 %v181, 0.041655596
  %v183 = vmul.f32 %v180, %v182
  %v184 = vadd.f32 %v183, -0.4999988
  %v185 = vmul.f32 %v180, %v184
  %v186 = vadd.f32 1.0, %v185
  %v187 = vmul.f32 %v178, %v178
  %v188 = vmul.f32 %v187, -0.00019511016
  %v189 = vadd.f32 %v188, 0.008332121
  %v190 = vmul.f32 %v187, %v189
  %v191 = vadd.f32 %v190, -0.16666654
  %v192 = vmul.f32 %v187, %v191
  %v193 = vadd.f32 %v192, 1.0
  %v194 = vmul.f32 %v193, %v178
  %vm195 = vweird.f32 %v51
  %v196 = vand.u32 %v179, 3
  %vm197 = vcmp.lt.s32.totalorder %v196, 2
  %vm198 = vcmp.eq.s32.totalorder %v196, 0
  %v199 = vxor.u32 %v194, 2147483648
  %v200 = vsel %vm198, %v186, %v199
  %vm201 = vcmp.eq.s32.totalorder %v196, 2
  %v202 = vxor.u32 %v186, 2147483648
  %v203 = vsel %vm201, %v202, %v194
  %v204 = vsel %vm197, %v200, %v203
  %v205 = vsel %vm195, nan, %v204
  %206 = vst [vmem:[%s3] sm:$0xff] %v205
  // Predicated region
  $region14: #{encode.1} parent=0 // pred_check
    _
  $region15: #{encode.1} parent=0 // pred_check_branch
    %208 = sbr.rel (0) target = $region17
  $region16: #{encode.1} parent=0 // pred_region
    _
  $region17: #{encode.1} parent=0 // pred_fallthru
    _
  // Predicated region
  $region18: #{encode.1} parent=0 // pred_check
    _
  $region19: #{encode.1} parent=0 // pred_check_branch
    %210 = sbr.rel (0) target = $region21
  $region20: #{encode.1} parent=0 // pred_region
    _
  $region21: #{encode.1} parent=0 // pred_fallthru
    _

</llo_original>
